<compile_context>
chip_gen: v7x
topology: tpu7x:2x2x1
jax: 0.10.0
libtpu: 0.0.40
codegen_flags: <defaults>
</compile_context>

<pallas_src>
import functools

import jax
import jax.numpy as jnp
from jax.experimental import pallas as pl
from jax.experimental.pallas import tpu as pltpu


# ---------------------------------------------------------------------------
# kernel
# ---------------------------------------------------------------------------

def _bert_layer_norm_kernel(x_ref, params_ref, o_ref, *, eps):
  """LayerNorm over the last dim of a (TM, H) row tile.

  params_ref packs gamma (row 0) and beta (row 1) as one (2, H) f32 slab.
  Rows are independent, so any garbage rows in a ragged last block cannot
  contaminate valid rows and their stores are masked off by Pallas.
  """
  x = x_ref[...].astype(jnp.float32)            # (TM, H) f32
  gamma = params_ref[0:1, :]                    # (1, H)
  beta = params_ref[1:2, :]                     # (1, H)

  u = jnp.mean(x, axis=-1, keepdims=True)       # (TM, 1)
  xc = x - u
  s = jnp.mean(xc * xc, axis=-1, keepdims=True)
  inv = jax.lax.rsqrt(s + eps)                  # EUP rsqrt; no VALU divide
  o_ref[...] = (xc * inv * gamma + beta).astype(o_ref.dtype)


# ---------------------------------------------------------------------------
# wrapper
# ---------------------------------------------------------------------------

def bert_layer_norm(x, gamma, beta, *, eps=1e-12, block_rows=None):
  """Applies BertLayerNorm over the last dimension of `x` (any leading dims)."""
  orig_shape = x.shape
  H = orig_shape[-1]

  x2d = x.reshape(-1, H)
  N = x2d.shape[0]

  if block_rows is None:
    # ~1 MiB f32 working tile; clamp to [16, 512] rows (512-row tiles already
    # hit ~85% of HBM roofline and give >=2 grid steps for megacore sharding).
    block_rows = (1 << 20) // max(1, H * 4)
    block_rows = max(16, min(512, block_rows))
  # Multiple of 16 rows: satisfies sublane tiling for f32 (8) and bf16 (16).
  block_rows = max(16, (block_rows // 16) * 16)

  if N <= block_rows:
    tm = N                      # full-extent block: always a legal shape
  else:
    tm = block_rows             # ragged last block handled by Pallas masking

  params = jnp.stack(
      [gamma.astype(jnp.float32), beta.astype(jnp.float32)], axis=0)  # (2, H)

  out = pl.pallas_call(
      functools.partial(_bert_layer_norm_kernel, eps=float(eps)),
      out_shape=jax.ShapeDtypeStruct((N, H), x.dtype),
      grid=(pl.cdiv(N, tm),),
      in_specs=[
          pl.BlockSpec((tm, H), lambda i: (i, 0)),    # row tile of x
          pl.BlockSpec((2, H), lambda i: (0, 0)),     # packed gamma/beta slab
      ],
      out_specs=pl.BlockSpec((tm, H), lambda i: (i, 0)),
      compiler_params=pltpu.CompilerParams(
          dimension_semantics=("parallel",)),
  )(x2d, params)

  return out.reshape(orig_shape)


# ---------------------------------------------------------------------------
# pure-JAX reference (mirrors the PyTorch forward line by line)
# ---------------------------------------------------------------------------

def reference_bert_layer_norm(x, gamma, beta, eps=1e-12):
  u = jnp.mean(x, axis=-1, keepdims=True)
  s = jnp.mean((x - u) ** 2, axis=-1, keepdims=True)
  xn = (x - u) / jnp.sqrt(s + eps)
  return gamma * xn + beta


# ---------------------------------------------------------------------------
# main
# ---------------------------------------------------------------------------

if __name__ == "__main__":
  key = jax.random.PRNGKey(0)
  k0, k1, k2, k3, k4 = jax.random.split(key, 5)

  # Primary case: lane-dense hidden (multiple of 128); auto tile = 512 rows ->
  # grid of 2 "parallel" steps (keeps both v7x TensorCores busy).
  B, S, Hd = 8, 128, 128
  x = jax.random.normal(k0, (B, S, Hd), jnp.float32)
  gamma = 1.0 + 0.05 * jax.random.normal(k1, (Hd,), jnp.float32)
  beta = 0.02 * jax.random.normal(k2, (Hd,), jnp.float32)

  out = jax.block_until_ready(bert_layer_norm(x, gamma, beta))
  ref = reference_bert_layer_norm(x, gamma, beta)
  assert out.shape == x.shape and out.dtype == x.dtype
  assert bool(jnp.all(jnp.isfinite(out)))
  err = float(jnp.max(jnp.abs(out - ref)))
  assert err < 1e-4, f"mismatch vs reference (lane-dense case): {err}"

  # Secondary case: toy shape with hidden < 128 and an odd row count
  # (full-extent-block path; module-init gamma=1, beta=0).
  x_small = jax.random.normal(k3, (2, 9, 32), jnp.float32)
  g_small = jnp.ones((32,), jnp.float32)
  b_small = jnp.zeros((32,), jnp.float32)
  out_small = jax.block_until_ready(bert_layer_norm(x_small, g_small, b_small))
  ref_small = reference_bert_layer_norm(x_small, g_small, b_small)
  err_small = float(jnp.max(jnp.abs(out_small - ref_small)))
  assert err_small < 1e-4, f"mismatch vs reference (toy case): {err_small}"

  # Ragged-grid case: row count not divisible by the tile (exercises the
  # masked out-of-bounds read/write path that replaced wrapper-side padding).
  x_rag = jax.random.normal(k4, (3, 100, 128), jnp.float32)
  out_rag = jax.block_until_ready(
      bert_layer_norm(x_rag, gamma, beta, block_rows=64))
  ref_rag = reference_bert_layer_norm(x_rag, gamma, beta)
  assert bool(jnp.all(jnp.isfinite(out_rag)))
  err_rag = float(jnp.max(jnp.abs(out_rag - ref_rag)))
  assert err_rag < 1e-4, f"mismatch vs reference (ragged case): {err_rag}"

  # bf16 case: input streamed in bf16, math in f32, output written in bf16.
  x_bf = jax.random.normal(k0, (4, 128, 256), jnp.float32)
  g_bf = 1.0 + 0.05 * jax.random.normal(k1, (256,), jnp.float32)
  b_bf = 0.02 * jax.random.normal(k2, (256,), jnp.float32)
  out_bf = jax.block_until_ready(
      bert_layer_norm(x_bf.astype(jnp.bfloat16), g_bf, b_bf))
  assert out_bf.dtype == jnp.bfloat16
  ref_bf = reference_bert_layer_norm(x_bf, g_bf, b_bf)
  err_bf = float(jnp.max(jnp.abs(out_bf.astype(jnp.float32) - ref_bf)))
  assert err_bf < 5e-2, f"mismatch vs reference (bf16 case): {err_bf}"

  print("KERNEL_OK")
</pallas_src>

<mosaic_0001>
module attributes {stable_mosaic.version = 11 : i64} {
  func.func @_bert_layer_norm_kernel(%arg0: i32, %arg1: memref<512x128xf32, #tpu.memory_space<vmem>>, %arg2: memref<2x128xf32, #tpu.memory_space<vmem>>, %arg3: memref<512x128xf32, #tpu.memory_space<vmem>>) attributes {dimension_semantics = [#tpu.dimension_semantics<parallel>], iteration_bounds = array<i64: 2>, scalar_prefetch = 0 : i64, scratch_operands = 0 : i64, tpu.core_type = #tpu.core_type<tc>, window_params = [{transform_indices = @transform_0, window_bounds = array<i64: 512, 128>}, {pipeline_mode = #tpu.pipeline_mode<synchronous>, transform_indices = @transform_1, window_bounds = array<i64: 2, 128>}, {transform_indices = @transform_2, window_bounds = array<i64: 512, 128>}]} {
    %c0 = arith.constant 0 : index
    %c0_0 = arith.constant 0 : index
    %0 = vector.load %arg1[%c0, %c0_0] : memref<512x128xf32, #tpu.memory_space<vmem>>, vector<512x128xf32>
    %c0_1 = arith.constant 0 : index
    %c0_2 = arith.constant 0 : index
    %1 = vector.load %arg2[%c0_1, %c0_2] : memref<2x128xf32, #tpu.memory_space<vmem>>, vector<1x128xf32>
    %c1 = arith.constant 1 : index
    %c0_3 = arith.constant 0 : index
    %2 = vector.load %arg2[%c1, %c0_3] : memref<2x128xf32, #tpu.memory_space<vmem>>, vector<1x128xf32>
    %cst = arith.constant dense<0.000000e+00> : vector<512xf32>
    %3 = vector.multi_reduction <add>, %0, %cst [1] : vector<512x128xf32> to vector<512xf32>
    %4 = vector.shape_cast %3 : vector<512xf32> to vector<512x1xf32>
    %cst_4 = arith.constant 1.280000e+02 : f32
    %5 = vector.broadcast %cst_4 : f32 to vector<512x1xf32>
    %6 = arith.divf %4, %5 : vector<512x1xf32>
    %7 = vector.broadcast %6 : vector<512x1xf32> to vector<512x128xf32>
    %8 = arith.subf %0, %7 : vector<512x128xf32>
    %9 = arith.mulf %8, %8 : vector<512x128xf32>
    %cst_5 = arith.constant dense<0.000000e+00> : vector<512xf32>
    %10 = vector.multi_reduction <add>, %9, %cst_5 [1] : vector<512x128xf32> to vector<512xf32>
    %11 = vector.shape_cast %10 : vector<512xf32> to vector<512x1xf32>
    %cst_6 = arith.constant 1.280000e+02 : f32
    %12 = vector.broadcast %cst_6 : f32 to vector<512x1xf32>
    %13 = arith.divf %11, %12 : vector<512x1xf32>
    %cst_7 = arith.constant 9.99999996E-13 : f32
    %14 = vector.broadcast %cst_7 : f32 to vector<512x1xf32>
    %15 = arith.addf %13, %14 : vector<512x1xf32>
    %16 = math.rsqrt %15 : vector<512x1xf32>
    %17 = vector.broadcast %16 : vector<512x1xf32> to vector<512x128xf32>
    %18 = arith.mulf %8, %17 : vector<512x128xf32>
    %19 = vector.broadcast %1 : vector<1x128xf32> to vector<512x128xf32>
    %20 = arith.mulf %18, %19 : vector<512x128xf32>
    %21 = vector.broadcast %2 : vector<1x128xf32> to vector<512x128xf32>
    %22 = arith.addf %20, %21 : vector<512x128xf32>
    %c0_8 = arith.constant 0 : index
    %c0_9 = arith.constant 0 : index
    %23 = vector.load %arg3[%c0_8, %c0_9] : memref<512x128xf32, #tpu.memory_space<vmem>>, vector<512x128xf32>
    tpu.vector_store %arg3[%c0_8, %c0_9], %22 {strides = array<i32>} : memref<512x128xf32, #tpu.memory_space<vmem>>, vector<512x128xf32>,
    return
  }
  func.func @transform_0(%arg0: i32) -> (i32, i32) {
    %c0_i32 = arith.constant 0 : i32
    %c0_i32_0 = arith.constant 0 : i32
    return %arg0, %c0_i32 : i32, i32
  }
  func.func @transform_1(%arg0: i32) -> (i32, i32) {
    %c0_i32 = arith.constant 0 : i32
    %c0_i32_0 = arith.constant 0 : i32
    %c0_i32_1 = arith.constant 0 : i32
    return %c0_i32, %c0_i32_0 : i32, i32
  }
  func.func @transform_2(%arg0: i32) -> (i32, i32) {
    %c0_i32 = arith.constant 0 : i32
    %c0_i32_0 = arith.constant 0 : i32
    return %arg0, %c0_i32 : i32, i32
  }
}

</mosaic_0001>

<llo_original>
// kernel: tpu_custom_call.1
$region0: #{tpu_custom_call.1}
  #allocation0 [shape = 'u32[]', space=smem, size = 0x4, offset = 0x4, fixed_abs, tag = 'smem constant byte address 0x4 - core index']
  #allocation1 [shape = 'u32[144,128]{1,0:T(1,128)}', space=vmem, size = 0x12000, scoped, tag = 'internal scratch']
  %s0 = inlined_call_operand.hbm [shape: f32[1024,128], index: 0, kind: input, shape index: {}]
  %s1 = inlined_call_operand.vmem [shape: f32[2,128], index: 1, kind: input, shape index: {}]
  %s2 = inlined_call_operand.hbm [shape: f32[1024,128], index: 2, kind: output, shape index: {}]
  %s3 = sld [smem:[#allocation0]]
  $region45: #{tpu_custom_call.1} parent=0
    _
  %s5 = ssub.s32 1, %s3
  %s6 = scalar_select 0, %s5, %s3
  $region1: #{tpu_custom_call.1} parent=0
    #allocation2 [shape = 'u8[524288]{0}', space=vmem, size = 0x80000, scoped, tag = 'input window, operand 0']
    #allocation3 [shape = 's32[2]{0}', space=sflag, size = 0x8, scoped, tag = 'scoped memory for tpu_custom_call.1']
    #allocation4 [shape = 's32[2]{0}', space=sflag, size = 0x8, scoped, tag = 'scoped memory for tpu_custom_call.1']
    #allocation5 [shape = 'u8[524288]{0}', space=vmem, size = 0x80000, scoped, tag = 'output window, operand 0']
    %7 = vsyncpa [#allocation3], 0
    %s8 = scalar_lea.sflag [#allocation3], 1
    %9 = vsyncpa %s8, 0
    %10 = vsyncpa [#allocation4], 0
    %s11 = scalar_lea.sflag [#allocation4], 1
    %12 = vsyncpa %s11, 0
    loop: start=0, step=1, limit=4
    $region2: #{tpu_custom_call.1} parent=1 // loop_pre_header
      _
    $region3: #{tpu_custom_call.1} parent=1 // loop_header
      %s14 = sphi 0, %s18
      %p15 = scmp.ge.s32.totalorder %s14, 4
      %s24 = sphi 0, %s26
      %s27 = sphi 0, %s24
      %s28 = sphi 0, %s27
      %s44 = sphi 0, %s28
      %s48 = sphi 0, %s48
      %s50 = sphi 0, %s48
      %s51 = sphi 0, %s50
      %s65 = sphi 0, %s51
      %s71 = sphi 0, %s73
      %s74 = sphi 0, %s71
      %s75 = sphi 0, %s74
      %s91 = sphi 0, %s75
    $region4: #{tpu_custom_call.1} parent=1 // loop_header_branch
      %17 = sbr.rel (%p15) target = $region8
    $region5: #{tpu_custom_call.1} parent=1 // loop_body
      %s19 = ssub.s32 %s14, 1
      %s20 = ssub.s32 %s14, 2
      %s21 = sadd.s32 %s14, 1
      %s22 = ssub.s32 %s14, %s21
      %p23 = scmp.eq.s32.totalorder %s22, 0
      %s25 = sadd.s32 %s24, 1
      %s26 = scalar_select %p23, %s24, %s25
      %p29 = pneg %p23
      %p30 = scmp.eq.s32.totalorder %s14, 1
      %p31 = por %p29, %p30
      %p32 = scmp.ne.s32.totalorder %s24, %s27
      %p33 = scmp.eq.s32.totalorder %s14, 0
      %p34 = por %p32, %p33
      %p35 = scmp.ne.s32.totalorder %s24, %s27
      %p36 = scmp.eq.s32.totalorder %s19, 1
      %p37 = por %p35, %p36
      %p38 = scmp.ne.s32.totalorder %s27, %s28
      %p39 = scmp.eq.s32.totalorder %s19, 0
      %p40 = por %p38, %p39
      %p41 = scmp.ne.s32.totalorder %s27, %s28
      %p42 = scmp.eq.s32.totalorder %s20, 1
      %p43 = por %p41, %p42
      %p45 = scmp.ne.s32.totalorder %s28, %s44
      %p46 = scmp.eq.s32.totalorder %s20, 0
      %p47 = por %p45, %p46
      %s49 = sadd.s32 %s48, 1
      %p52 = scmp.eq.s32.totalorder %s14, 1
      %p53 = scmp.ne.s32.totalorder %s48, %s50
      %p54 = scmp.eq.s32.totalorder %s14, 0
      %p55 = por %p53, %p54
      %p56 = scmp.ne.s32.totalorder %s48, %s50
      %p57 = scmp.eq.s32.totalorder %s19, 1
      %p58 = por %p56, %p57
      %p59 = scmp.ne.s32.totalorder %s50, %s51
      %p60 = scmp.eq.s32.totalorder %s19, 0
      %p61 = por %p59, %p60
      %p62 = scmp.ne.s32.totalorder %s50, %s51
      %p63 = scmp.eq.s32.totalorder %s20, 1
      %p64 = por %p62, %p63
      %p66 = scmp.ne.s32.totalorder %s51, %s65
      %p67 = scmp.eq.s32.totalorder %s20, 0
      %p68 = por %p66, %p67
      %s69 = ssub.s32 %s14, %s21
      %p70 = scmp.eq.s32.totalorder %s69, 0
      %s72 = sadd.s32 %s71, 1
      %s73 = scalar_select %p70, %s71, %s72
      %p76 = pneg %p70
      %p77 = scmp.eq.s32.totalorder %s14, 1
      %p78 = por %p76, %p77
      %p79 = scmp.ne.s32.totalorder %s71, %s74
      %p80 = scmp.eq.s32.totalorder %s14, 0
      %p81 = por %p79, %p80
      %p82 = scmp.ne.s32.totalorder %s71, %s74
      %p83 = scmp.eq.s32.totalorder %s19, 1
      %p84 = por %p82, %p83
      %p85 = scmp.ne.s32.totalorder %s74, %s75
      %p86 = scmp.eq.s32.totalorder %s19, 0
      %p87 = por %p85, %p86
      %p88 = scmp.ne.s32.totalorder %s74, %s75
      %p89 = scmp.eq.s32.totalorder %s20, 1
      %p90 = por %p88, %p89
      %p92 = scmp.ne.s32.totalorder %s75, %s91
      %p93 = scmp.eq.s32.totalorder %s20, 0
      %p94 = por %p92, %p93
      %p95 = scmp.le.s32.totalorder 1, %s14
      %p96 = scmp.lt.s32.totalorder %s14, 3
      %p97 = pnand %p95, %p96
      %p98 = pneg %p97
      // Predicated region
      $region9: #{tpu_custom_call.1} parent=5 // pred_check
        _
      $region10: #{tpu_custom_call.1} parent=5 // pred_check_branch
        %100 = sbr.rel (%p97) target = $region12
      $region11: #{tpu_custom_call.1} parent=5 // pred_region
        %s101 = ssub.s32 %s14, 1
        // Predicated region
        $region13: #{tpu_custom_call.1} parent=11 // pred_check
          %p102 = pneg %p61
        $region14: #{tpu_custom_call.1} parent=11 // pred_check_branch
          %104 = sbr.rel (%p102) target = $region16
        $region15: #{tpu_custom_call.1} parent=11 // pred_region
          _
        $region16: #{tpu_custom_call.1} parent=11 // pred_fallthru
          _
      $region12: #{tpu_custom_call.1} parent=5 // pred_fallthru
        _
      %p105 = scmp.lt.s32.totalorder %s14, 2
      // Predicated region
      $region17: #{tpu_custom_call.1} parent=5 // pred_check
        %p106 = pneg %p105
      $region18: #{tpu_custom_call.1} parent=5 // pred_check_branch
        %108 = sbr.rel (%p106) target = $region20
      $region19: #{tpu_custom_call.1} parent=5 // pred_region
        // Predicated region
        $region21: #{tpu_custom_call.1} parent=19 // pred_check
          %p109 = pneg %p34
        $region22: #{tpu_custom_call.1} parent=19 // pred_check_branch
          %111 = sbr.rel (%p109) target = $region24
        $region23: #{tpu_custom_call.1} parent=19 // pred_region
          %s112 = sand.u32 %s24, 1
          %s113 = scalar_lea.sflag [#allocation3], %s112
          %s114 = sand.u32 %s24, 1
          %s115 = smul.addr %s114, 512
          %s116 = scalar_lea.vmem [#allocation2], %s115
          %s117 = smul.u32 64, %s14
          %s119 = ssub.s32 8192, 8192
          %120 = vsyncadd %s113, %s119
          %s121 = smul.addr %s117, 128
          %s122 = scalar_lea.hbm %s0, %s121
          %s123 = sshll.u32 %s116, 4
          %s124 = int_to_ptr.vmem [resolvable:$true] %s123
          %129 = dma.hbm_to_vmem [thread:$0]  %s122, 8192, %s124, %s113, 128, 128, 8
        $region24: #{tpu_custom_call.1} parent=19 // pred_fallthru
          _
      $region20: #{tpu_custom_call.1} parent=5 // pred_fallthru
        _
      %p130 = scmp.le.s32.totalorder 1, %s14
      %p131 = scmp.lt.s32.totalorder %s14, 3
      %p132 = pnand %p130, %p131
      %p133 = pneg %p132
      // Predicated region
      $region25: #{tpu_custom_call.1} parent=5 // pred_check
        _
      $region26: #{tpu_custom_call.1} parent=5 // pred_check_branch
        %135 = sbr.rel (%p132) target = $region28
      $region27: #{tpu_custom_call.1} parent=5 // pred_region
        %s136 = ssub.s32 %s14, 1
        %s137 = sand.u32 %s27, 1
        %s138 = scalar_lea.sflag [#allocation3], %s137
        %s139 = sand.u32 %s27, 1
        %s140 = smul.addr %s139, 512
        %s141 = scalar_lea.vmem [#allocation2], %s140
        // Predicated region
        $region29: #{tpu_custom_call.1} parent=27 // pred_check
          %p142 = pneg %p40
        $region30: #{tpu_custom_call.1} parent=27 // pred_check_branch
          %144 = sbr.rel (%p142) target = $region32
        $region31: #{tpu_custom_call.1} parent=27 // pred_region
          %145 = dma.done %s138, 8192
        $region32: #{tpu_custom_call.1} parent=27 // pred_fallthru
          _
        %s146 = sand.u32 %s27, 1
        %s147 = scalar_lea.sflag [#allocation3], %s146
        %s148 = sand.u32 %s27, 1
        %s149 = smul.addr %s148, 512
        %s150 = scalar_lea.vmem [#allocation2], %s149
        %p151 = pneg %p40
        %p152 = pneg %p37
        %p153 = pneg %p61
        %p154 = pneg %p58
        %p155 = pneg %p87
        %p156 = pneg %p84
        %s157 = sand.u32 %s74, 1
        %s158 = scalar_lea.sflag [#allocation4], %s157
        %s159 = sand.u32 %s74, 1
        %s160 = smul.addr %s159, 512
        %s161 = scalar_lea.vmem [#allocation5], %s160
        %s162 = smul.u32 64, %s19
        %s163 = smul.u32 64, %s19
        %v164 = vld [vmem:[%s141] sm:$0xff]
        %v165 = vld [vmem:[%s141 + $0x8] sm:$0xff]
        %v166 = vld [vmem:[%s141 + $0x10] sm:$0xff]
        %v167 = vld [vmem:[%s141 + $0x18] sm:$0xff]
        %v168 = vld [vmem:[%s141 + $0x20] sm:$0xff]
        %v169 = vld [vmem:[%s141 + $0x28] sm:$0xff]
        %v170 = vld [vmem:[%s141 + $0x30] sm:$0xff]
        %v171 = vld [vmem:[%s141 + $0x38] sm:$0xff]
        %v172 = vld [vmem:[%s141 + $0x40] sm:$0xff]
        %v173 = vld [vmem:[%s141 + $0x48] sm:$0xff]
        %v174 = vld [vmem:[%s141 + $0x50] sm:$0xff]
        %v175 = vld [vmem:[%s141 + $0x58] sm:$0xff]
        %v176 = vld [vmem:[%s141 + $0x60] sm:$0xff]
        %v177 = vld [vmem:[%s141 + $0x68] sm:$0xff]
        %v178 = vld [vmem:[%s141 + $0x70] sm:$0xff]
        %v179 = vld [vmem:[%s141 + $0x78] sm:$0xff]
        %v180 = vld [vmem:[%s141 + $0x80] sm:$0xff]
        %v181 = vld [vmem:[%s141 + $0x88] sm:$0xff]
        %v182 = vld [vmem:[%s141 + $0x90] sm:$0xff]
        %v183 = vld [vmem:[%s141 + $0x98] sm:$0xff]
        %v184 = vld [vmem:[%s141 + $0xa0] sm:$0xff]
        %v185 = vld [vmem:[%s141 + $0xa8] sm:$0xff]
        %v186 = vld [vmem:[%s141 + $0xb0] sm:$0xff]
        %v187 = vld [vmem:[%s141 + $0xb8] sm:$0xff]
        %v188 = vld [vmem:[%s141 + $0xc0] sm:$0xff]
        %v189 = vld [vmem:[%s141 + $0xc8] sm:$0xff]
        %v190 = vld [vmem:[%s141 + $0xd0] sm:$0xff]
        %v191 = vld [vmem:[%s141 + $0xd8] sm:$0xff]
        %v192 = vld [vmem:[%s141 + $0xe0] sm:$0xff]
        %v193 = vld [vmem:[%s141 + $0xe8] sm:$0xff]
        %v194 = vld [vmem:[%s141 + $0xf0] sm:$0xff]
        %v195 = vld [vmem:[%s141 + $0xf8] sm:$0xff]
        %v196 = vld [vmem:[%s141 + $0x100] sm:$0xff]
        %v197 = vld [vmem:[%s141 + $0x108] sm:$0xff]
        %v198 = vld [vmem:[%s141 + $0x110] sm:$0xff]
        %v199 = vld [vmem:[%s141 + $0x118] sm:$0xff]
        %v200 = vld [vmem:[%s141 + $0x120] sm:$0xff]
        %v201 = vld [vmem:[%s141 + $0x128] sm:$0xff]
        %v202 = vld [vmem:[%s141 + $0x130] sm:$0xff]
        %v203 = vld [vmem:[%s141 + $0x138] sm:$0xff]
        %v204 = vld [vmem:[%s141 + $0x140] sm:$0xff]
        %v205 = vld [vmem:[%s141 + $0x148] sm:$0xff]
        %v206 = vld [vmem:[%s141 + $0x150] sm:$0xff]
        %v207 = vld [vmem:[%s141 + $0x158] sm:$0xff]
        %v208 = vld [vmem:[%s141 + $0x160] sm:$0xff]
        %v209 = vld [vmem:[%s141 + $0x168] sm:$0xff]
        %v210 = vld [vmem:[%s141 + $0x170] sm:$0xff]
        %v211 = vld [vmem:[%s141 + $0x178] sm:$0xff]
        %v212 = vld [vmem:[%s141 + $0x180] sm:$0xff]
        %v213 = vld [vmem:[%s141 + $0x188] sm:$0xff]
        %v214 = vld [vmem:[%s141 + $0x190] sm:$0xff]
        %v215 = vld [vmem:[%s141 + $0x198] sm:$0xff]
        %v216 = vld [vmem:[%s141 + $0x1a0] sm:$0xff]
        %v217 = vld [vmem:[%s141 + $0x1a8] sm:$0xff]
        %v218 = vld [vmem:[%s141 + $0x1b0] sm:$0xff]
        %v219 = vld [vmem:[%s141 + $0x1b8] sm:$0xff]
        %v220 = vld [vmem:[%s141 + $0x1c0] sm:$0xff]
        %v221 = vld [vmem:[%s141 + $0x1c8] sm:$0xff]
        %v222 = vld [vmem:[%s141 + $0x1d0] sm:$0xff]
        %v223 = vld [vmem:[%s141 + $0x1d8] sm:$0xff]
        %v224 = vld [vmem:[%s141 + $0x1e0] sm:$0xff]
        %v225 = vld [vmem:[%s141 + $0x1e8] sm:$0xff]
        %v226 = vld [vmem:[%s141 + $0x1f0] sm:$0xff]
        %v227 = vld [vmem:[%s141 + $0x1f8] sm:$0xff]
        %v228 = vld [vmem:[%s1] sm:$0x1]
        %v229 = vld [vmem:[%s1 + $0x1] sm:$0x1]
        %230 = vadd.xlane.f32.xlu0 %v164
        %v231 = vpop.xlane.xlu0 %230
        %232 = vadd.xlane.f32.xlu0 %v165
        %v233 = vpop.xlane.xlu0 %232
        %234 = vadd.xlane.f32.xlu0 %v166
        %v235 = vpop.xlane.xlu0 %234
        %236 = vadd.xlane.f32.xlu0 %v167
        %v237 = vpop.xlane.xlu0 %236
        %238 = vadd.xlane.f32.xlu0 %v168
        %v239 = vpop.xlane.xlu0 %238
        %240 = vadd.xlane.f32.xlu0 %v169
        %v241 = vpop.xlane.xlu0 %240
        %242 = vadd.xlane.f32.xlu0 %v170
        %v243 = vpop.xlane.xlu0 %242
        %244 = vadd.xlane.f32.xlu0 %v171
        %v245 = vpop.xlane.xlu0 %244
        %246 = vadd.xlane.f32.xlu0 %v172
        %v247 = vpop.xlane.xlu0 %246
        %248 = vadd.xlane.f32.xlu0 %v173
        %v249 = vpop.xlane.xlu0 %248
        %250 = vadd.xlane.f32.xlu0 %v174
        %v251 = vpop.xlane.xlu0 %250
        %252 = vadd.xlane.f32.xlu0 %v175
        %v253 = vpop.xlane.xlu0 %252
        %254 = vadd.xlane.f32.xlu0 %v176
        %v255 = vpop.xlane.xlu0 %254
        %256 = vadd.xlane.f32.xlu0 %v177
        %v257 = vpop.xlane.xlu0 %256
        %258 = vadd.xlane.f32.xlu0 %v178
        %v259 = vpop.xlane.xlu0 %258
        %260 = vadd.xlane.f32.xlu0 %v179
        %v261 = vpop.xlane.xlu0 %260
        %262 = vadd.xlane.f32.xlu0 %v180
        %v263 = vpop.xlane.xlu0 %262
        %264 = vadd.xlane.f32.xlu0 %v181
        %v265 = vpop.xlane.xlu0 %264
        %266 = vadd.xlane.f32.xlu0 %v182
        %v267 = vpop.xlane.xlu0 %266
        %268 = vadd.xlane.f32.xlu0 %v183
        %v269 = vpop.xlane.xlu0 %268
        %270 = vadd.xlane.f32.xlu0 %v184
        %v271 = vpop.xlane.xlu0 %270
        %272 = vadd.xlane.f32.xlu0 %v185
        %v273 = vpop.xlane.xlu0 %272
        %274 = vadd.xlane.f32.xlu0 %v186
        %v275 = vpop.xlane.xlu0 %274
        %276 = vadd.xlane.f32.xlu0 %v187
        %v277 = vpop.xlane.xlu0 %276
        %278 = vadd.xlane.f32.xlu0 %v188
        %v279 = vpop.xlane.xlu0 %278
        %280 = vadd.xlane.f32.xlu0 %v189
        %v281 = vpop.xlane.xlu0 %280
        %282 = vadd.xlane.f32.xlu0 %v190
        %v283 = vpop.xlane.xlu0 %282
        %284 = vadd.xlane.f32.xlu0 %v191
        %v285 = vpop.xlane.xlu0 %284
        %286 = vadd.xlane.f32.xlu0 %v192
        %v287 = vpop.xlane.xlu0 %286
        %288 = vadd.xlane.f32.xlu0 %v193
        %v289 = vpop.xlane.xlu0 %288
        %290 = vadd.xlane.f32.xlu0 %v194
        %v291 = vpop.xlane.xlu0 %290
        %292 = vadd.xlane.f32.xlu0 %v195
        %v293 = vpop.xlane.xlu0 %292
        %294 = vadd.xlane.f32.xlu0 %v196
        %v295 = vpop.xlane.xlu0 %294
        %296 = vadd.xlane.f32.xlu0 %v197
        %v297 = vpop.xlane.xlu0 %296
        %298 = vadd.xlane.f32.xlu0 %v198
        %v299 = vpop.xlane.xlu0 %298
        %300 = vadd.xlane.f32.xlu0 %v199
        %v301 = vpop.xlane.xlu0 %300
        %302 = vadd.xlane.f32.xlu0 %v200
        %v303 = vpop.xlane.xlu0 %302
        %304 = vadd.xlane.f32.xlu0 %v201
        %v305 = vpop.xlane.xlu0 %304
        %306 = vadd.xlane.f32.xlu0 %v202
        %v307 = vpop.xlane.xlu0 %306
        %308 = vadd.xlane.f32.xlu0 %v203
        %v309 = vpop.xlane.xlu0 %308
        %310 = vadd.xlane.f32.xlu0 %v204
        %v311 = vpop.xlane.xlu0 %310
        %312 = vadd.xlane.f32.xlu0 %v205
        %v313 = vpop.xlane.xlu0 %312
        %314 = vadd.xlane.f32.xlu0 %v206
        %v315 = vpop.xlane.xlu0 %314
        %316 = vadd.xlane.f32.xlu0 %v207
        %v317 = vpop.xlane.xlu0 %316
        %318 = vadd.xlane.f32.xlu0 %v208
        %v319 = vpop.xlane.xlu0 %318
        %320 = vadd.xlane.f32.xlu0 %v209
        %v321 = vpop.xlane.xlu0 %320
        %322 = vadd.xlane.f32.xlu0 %v210
        %v323 = vpop.xlane.xlu0 %322
        %324 = vadd.xlane.f32.xlu0 %v211
        %v325 = vpop.xlane.xlu0 %324
        %326 = vadd.xlane.f32.xlu0 %v212
        %v327 = vpop.xlane.xlu0 %326
        %328 = vadd.xlane.f32.xlu0 %v213
        %v329 = vpop.xlane.xlu0 %328
        %330 = vadd.xlane.f32.xlu0 %v214
        %v331 = vpop.xlane.xlu0 %330
        %332 = vadd.xlane.f32.xlu0 %v215
        %v333 = vpop.xlane.xlu0 %332
        %334 = vadd.xlane.f32.xlu0 %v216
        %v335 = vpop.xlane.xlu0 %334
        %336 = vadd.xlane.f32.xlu0 %v217
        %v337 = vpop.xlane.xlu0 %336
        %338 = vadd.xlane.f32.xlu0 %v218
        %v339 = vpop.xlane.xlu0 %338
        %340 = vadd.xlane.f32.xlu0 %v219
        %v341 = vpop.xlane.xlu0 %340
        %342 = vadd.xlane.f32.xlu0 %v220
        %v343 = vpop.xlane.xlu0 %342
        %344 = vadd.xlane.f32.xlu0 %v221
        %v345 = vpop.xlane.xlu0 %344
        %346 = vadd.xlane.f32.xlu0 %v222
        %v347 = vpop.xlane.xlu0 %346
        %348 = vadd.xlane.f32.xlu0 %v223
        %v349 = vpop.xlane.xlu0 %348
        %350 = vadd.xlane.f32.xlu0 %v224
        %v351 = vpop.xlane.xlu0 %350
        %352 = vadd.xlane.f32.xlu0 %v225
        %v353 = vpop.xlane.xlu0 %352
        %354 = vadd.xlane.f32.xlu0 %v226
        %v355 = vpop.xlane.xlu0 %354
        %356 = vadd.xlane.f32.xlu0 %v227
        %v357 = vpop.xlane.xlu0 %356
        %v358 = vrcp.pop 128.0
        %v359 = vmul.f32 %v231, %v358
        %v360 = vmul.f32 %v233, %v358
        %v361 = vmul.f32 %v235, %v358
        %v362 = vmul.f32 %v237, %v358
        %v363 = vmul.f32 %v239, %v358
        %v364 = vmul.f32 %v241, %v358
        %v365 = vmul.f32 %v243, %v358
        %v366 = vmul.f32 %v245, %v358
        %v367 = vmul.f32 %v247, %v358
        %v368 = vmul.f32 %v249, %v358
        %v369 = vmul.f32 %v251, %v358
        %v370 = vmul.f32 %v253, %v358
        %v371 = vmul.f32 %v255, %v358
        %v372 = vmul.f32 %v257, %v358
        %v373 = vmul.f32 %v259, %v358
        %v374 = vmul.f32 %v261, %v358
        %v375 = vmul.f32 %v263, %v358
        %v376 = vmul.f32 %v265, %v358
        %v377 = vmul.f32 %v267, %v358
        %v378 = vmul.f32 %v269, %v358
        %v379 = vmul.f32 %v271, %v358
        %v380 = vmul.f32 %v273, %v358
        %v381 = vmul.f32 %v275, %v358
        %v382 = vmul.f32 %v277, %v358
        %v383 = vmul.f32 %v279, %v358
        %v384 = vmul.f32 %v281, %v358
        %v385 = vmul.f32 %v283, %v358
        %v386 = vmul.f32 %v285, %v358
        %v387 = vmul.f32 %v287, %v358
        %v388 = vmul.f32 %v289, %v358
        %v389 = vmul.f32 %v291, %v358
        %v390 = vmul.f32 %v293, %v358
        %v391 = vmul.f32 %v295, %v358
        %v392 = vmul.f32 %v297, %v358
        %v393 = vmul.f32 %v299, %v358
        %v394 = vmul.f32 %v301, %v358
        %v395 = vmul.f32 %v303, %v358
        %v396 = vmul.f32 %v305, %v358
        %v397 = vmul.f32 %v307, %v358
        %v398 = vmul.f32 %v309, %v358
        %v399 = vmul.f32 %v311, %v358
        %v400 = vmul.f32 %v313, %v358
        %v401 = vmul.f32 %v315, %v358
        %v402 = vmul.f32 %v317, %v358
        %v403 = vmul.f32 %v319, %v358
        %v404 = vmul.f32 %v321, %v358
        %v405 = vmul.f32 %v323, %v358
        %v406 = vmul.f32 %v325, %v358
        %v407 = vmul.f32 %v327, %v358
        %v408 = vmul.f32 %v329, %v358
        %v409 = vmul.f32 %v331, %v358
        %v410 = vmul.f32 %v333, %v358
        %v411 = vmul.f32 %v335, %v358
        %v412 = vmul.f32 %v337, %v358
        %v413 = vmul.f32 %v339, %v358
        %v414 = vmul.f32 %v341, %v358
        %v415 = vmul.f32 %v343, %v358
        %v416 = vmul.f32 %v345, %v358
        %v417 = vmul.f32 %v347, %v358
        %v418 = vmul.f32 %v349, %v358
        %v419 = vmul.f32 %v351, %v358
        %v420 = vmul.f32 %v353, %v358
        %v421 = vmul.f32 %v355, %v358
        %v422 = vmul.f32 %v357, %v358
        %v423 = vsub.f32 %v164, %v359
        %v424 = vsub.f32 %v165, %v360
        %v425 = vsub.f32 %v166, %v361
        %v426 = vsub.f32 %v167, %v362
        %v427 = vsub.f32 %v168, %v363
        %v428 = vsub.f32 %v169, %v364
        %v429 = vsub.f32 %v170, %v365
        %v430 = vsub.f32 %v171, %v366
        %v431 = vsub.f32 %v172, %v367
        %v432 = vsub.f32 %v173, %v368
        %v433 = vsub.f32 %v174, %v369
        %v434 = vsub.f32 %v175, %v370
        %v435 = vsub.f32 %v176, %v371
        %v436 = vsub.f32 %v177, %v372
        %v437 = vsub.f32 %v178, %v373
        %v438 = vsub.f32 %v179, %v374
        %v439 = vsub.f32 %v180, %v375
        %v440 = vsub.f32 %v181, %v376
        %v441 = vsub.f32 %v182, %v377
        %v442 = vsub.f32 %v183, %v378
        %v443 = vsub.f32 %v184, %v379
        %v444 = vsub.f32 %v185, %v380
        %v445 = vsub.f32 %v186, %v381
        %v446 = vsub.f32 %v187, %v382
        %v447 = vsub.f32 %v188, %v383
        %v448 = vsub.f32 %v189, %v384
        %v449 = vsub.f32 %v190, %v385
        %v450 = vsub.f32 %v191, %v386
        %v451 = vsub.f32 %v192, %v387
        %v452 = vsub.f32 %v193, %v388
        %v453 = vsub.f32 %v194, %v389
        %v454 = vsub.f32 %v195, %v390
        %v455 = vsub.f32 %v196, %v391
        %v456 = vsub.f32 %v197, %v392
        %v457 = vsub.f32 %v198, %v393
        %v458 = vsub.f32 %v199, %v394
        %v459 = vsub.f32 %v200, %v395
        %v460 = vsub.f32 %v201, %v396
        %v461 = vsub.f32 %v202, %v397
        %v462 = vsub.f32 %v203, %v398
        %v463 = vsub.f32 %v204, %v399
        %v464 = vsub.f32 %v205, %v400
        %v465 = vsub.f32 %v206, %v401
        %v466 = vsub.f32 %v207, %v402
        %v467 = vsub.f32 %v208, %v403
        %v468 = vsub.f32 %v209, %v404
        %v469 = vsub.f32 %v210, %v405
        %v470 = vsub.f32 %v211, %v406
        %v471 = vsub.f32 %v212, %v407
        %v472 = vsub.f32 %v213, %v408
        %v473 = vsub.f32 %v214, %v409
        %v474 = vsub.f32 %v215, %v410
        %v475 = vsub.f32 %v216, %v411
        %v476 = vsub.f32 %v217, %v412
        %v477 = vsub.f32 %v218, %v413
        %v478 = vsub.f32 %v219, %v414
        %v479 = vsub.f32 %v220, %v415
        %v480 = vsub.f32 %v221, %v416
        %v481 = vsub.f32 %v222, %v417
        %v482 = vsub.f32 %v223, %v418
        %v483 = vsub.f32 %v224, %v419
        %v484 = vsub.f32 %v225, %v420
        %v485 = vsub.f32 %v226, %v421
        %v486 = vsub.f32 %v227, %v422
        %v487 = vmul.f32 %v423, %v423
        %v488 = vmul.f32 %v424, %v424
        %v489 = vmul.f32 %v425, %v425
        %v490 = vmul.f32 %v426, %v426
        %v491 = vmul.f32 %v427, %v427
        %v492 = vmul.f32 %v428, %v428
        %v493 = vmul.f32 %v429, %v429
        %v494 = vmul.f32 %v430, %v430
        %v495 = vmul.f32 %v431, %v431
        %v496 = vmul.f32 %v432, %v432
        %v497 = vmul.f32 %v433, %v433
        %v498 = vmul.f32 %v434, %v434
        %v499 = vmul.f32 %v435, %v435
        %v500 = vmul.f32 %v436, %v436
        %v501 = vmul.f32 %v437, %v437
        %v502 = vmul.f32 %v438, %v438
        %v503 = vmul.f32 %v439, %v439
        %v504 = vmul.f32 %v440, %v440
        %v505 = vmul.f32 %v441, %v441
        %v506 = vmul.f32 %v442, %v442
        %v507 = vmul.f32 %v443, %v443
        %v508 = vmul.f32 %v444, %v444
        %v509 = vmul.f32 %v445, %v445
        %v510 = vmul.f32 %v446, %v446
        %v511 = vmul.f32 %v447, %v447
        %v512 = vmul.f32 %v448, %v448
        %v513 = vmul.f32 %v449, %v449
        %v514 = vmul.f32 %v450, %v450
        %v515 = vmul.f32 %v451, %v451
        %v516 = vmul.f32 %v452, %v452
        %v517 = vmul.f32 %v453, %v453
        %v518 = vmul.f32 %v454, %v454
        %v519 = vmul.f32 %v455, %v455
        %v520 = vmul.f32 %v456, %v456
        %v521 = vmul.f32 %v457, %v457
        %v522 = vmul.f32 %v458, %v458
        %v523 = vmul.f32 %v459, %v459
        %v524 = vmul.f32 %v460, %v460
        %v525 = vmul.f32 %v461, %v461
        %v526 = vmul.f32 %v462, %v462
        %v527 = vmul.f32 %v463, %v463
        %v528 = vmul.f32 %v464, %v464
        %v529 = vmul.f32 %v465, %v465
        %v530 = vmul.f32 %v466, %v466
        %v531 = vmul.f32 %v467, %v467
        %v532 = vmul.f32 %v468, %v468
        %v533 = vmul.f32 %v469, %v469
        %v534 = vmul.f32 %v470, %v470
        %v535 = vmul.f32 %v471, %v471
        %v536 = vmul.f32 %v472, %v472
        %v537 = vmul.f32 %v473, %v473
        %v538 = vmul.f32 %v474, %v474
        %v539 = vmul.f32 %v475, %v475
        %v540 = vmul.f32 %v476, %v476
        %v541 = vmul.f32 %v477, %v477
        %v542 = vmul.f32 %v478, %v478
        %v543 = vmul.f32 %v479, %v479
        %v544 = vmul.f32 %v480, %v480
        %v545 = vmul.f32 %v481, %v481
        %v546 = vmul.f32 %v482, %v482
        %v547 = vmul.f32 %v483, %v483
        %v548 = vmul.f32 %v484, %v484
        %v549 = vmul.f32 %v485, %v485
        %v550 = vmul.f32 %v486, %v486
        %551 = vadd.xlane.f32.xlu0 %v487
        %v552 = vpop.xlane.xlu0 %551
        %553 = vadd.xlane.f32.xlu0 %v488
        %v554 = vpop.xlane.xlu0 %553
        %555 = vadd.xlane.f32.xlu0 %v489
        %v556 = vpop.xlane.xlu0 %555
        %557 = vadd.xlane.f32.xlu0 %v490
        %v558 = vpop.xlane.xlu0 %557
        %559 = vadd.xlane.f32.xlu0 %v491
        %v560 = vpop.xlane.xlu0 %559
        %561 = vadd.xlane.f32.xlu0 %v492
        %v562 = vpop.xlane.xlu0 %561
        %563 = vadd.xlane.f32.xlu0 %v493
        %v564 = vpop.xlane.xlu0 %563
        %565 = vadd.xlane.f32.xlu0 %v494
        %v566 = vpop.xlane.xlu0 %565
        %567 = vadd.xlane.f32.xlu0 %v495
        %v568 = vpop.xlane.xlu0 %567
        %569 = vadd.xlane.f32.xlu0 %v496
        %v570 = vpop.xlane.xlu0 %569
        %571 = vadd.xlane.f32.xlu0 %v497
        %v572 = vpop.xlane.xlu0 %571
        %573 = vadd.xlane.f32.xlu0 %v498
        %v574 = vpop.xlane.xlu0 %573
        %575 = vadd.xlane.f32.xlu0 %v499
        %v576 = vpop.xlane.xlu0 %575
        %577 = vadd.xlane.f32.xlu0 %v500
        %v578 = vpop.xlane.xlu0 %577
        %579 = vadd.xlane.f32.xlu0 %v501
        %v580 = vpop.xlane.xlu0 %579
        %581 = vadd.xlane.f32.xlu0 %v502
        %v582 = vpop.xlane.xlu0 %581
        %583 = vadd.xlane.f32.xlu0 %v503
        %v584 = vpop.xlane.xlu0 %583
        %585 = vadd.xlane.f32.xlu0 %v504
        %v586 = vpop.xlane.xlu0 %585
        %587 = vadd.xlane.f32.xlu0 %v505
        %v588 = vpop.xlane.xlu0 %587
        %589 = vadd.xlane.f32.xlu0 %v506
        %v590 = vpop.xlane.xlu0 %589
        %591 = vadd.xlane.f32.xlu0 %v507
        %v592 = vpop.xlane.xlu0 %591
        %593 = vadd.xlane.f32.xlu0 %v508
        %v594 = vpop.xlane.xlu0 %593
        %595 = vadd.xlane.f32.xlu0 %v509
        %v596 = vpop.xlane.xlu0 %595
        %597 = vadd.xlane.f32.xlu0 %v510
        %v598 = vpop.xlane.xlu0 %597
        %599 = vadd.xlane.f32.xlu0 %v511
        %v600 = vpop.xlane.xlu0 %599
        %601 = vadd.xlane.f32.xlu0 %v512
        %v602 = vpop.xlane.xlu0 %601
        %603 = vadd.xlane.f32.xlu0 %v513
        %v604 = vpop.xlane.xlu0 %603
        %605 = vadd.xlane.f32.xlu0 %v514
        %v606 = vpop.xlane.xlu0 %605
        %607 = vadd.xlane.f32.xlu0 %v515
        %v608 = vpop.xlane.xlu0 %607
        %609 = vadd.xlane.f32.xlu0 %v516
        %v610 = vpop.xlane.xlu0 %609
        %611 = vadd.xlane.f32.xlu0 %v517
        %v612 = vpop.xlane.xlu0 %611
        %613 = vadd.xlane.f32.xlu0 %v518
        %v614 = vpop.xlane.xlu0 %613
        %615 = vadd.xlane.f32.xlu0 %v519
        %v616 = vpop.xlane.xlu0 %615
        %617 = vadd.xlane.f32.xlu0 %v520
        %v618 = vpop.xlane.xlu0 %617
        %619 = vadd.xlane.f32.xlu0 %v521
        %v620 = vpop.xlane.xlu0 %619
        %621 = vadd.xlane.f32.xlu0 %v522
        %v622 = vpop.xlane.xlu0 %621
        %623 = vadd.xlane.f32.xlu0 %v523
        %v624 = vpop.xlane.xlu0 %623
        %625 = vadd.xlane.f32.xlu0 %v524
        %v626 = vpop.xlane.xlu0 %625
        %627 = vadd.xlane.f32.xlu0 %v525
        %v628 = vpop.xlane.xlu0 %627
        %629 = vadd.xlane.f32.xlu0 %v526
        %v630 = vpop.xlane.xlu0 %629
        %631 = vadd.xlane.f32.xlu0 %v527
        %v632 = vpop.xlane.xlu0 %631
        %633 = vadd.xlane.f32.xlu0 %v528
        %v634 = vpop.xlane.xlu0 %633
        %635 = vadd.xlane.f32.xlu0 %v529
        %v636 = vpop.xlane.xlu0 %635
        %637 = vadd.xlane.f32.xlu0 %v530
        %v638 = vpop.xlane.xlu0 %637
        %639 = vadd.xlane.f32.xlu0 %v531
        %v640 = vpop.xlane.xlu0 %639
        %641 = vadd.xlane.f32.xlu0 %v532
        %v642 = vpop.xlane.xlu0 %641
        %643 = vadd.xlane.f32.xlu0 %v533
        %v644 = vpop.xlane.xlu0 %643
        %645 = vadd.xlane.f32.xlu0 %v534
        %v646 = vpop.xlane.xlu0 %645
        %647 = vadd.xlane.f32.xlu0 %v535
        %v648 = vpop.xlane.xlu0 %647
        %649 = vadd.xlane.f32.xlu0 %v536
        %v650 = vpop.xlane.xlu0 %649
        %651 = vadd.xlane.f32.xlu0 %v537
        %v652 = vpop.xlane.xlu0 %651
        %653 = vadd.xlane.f32.xlu0 %v538
        %v654 = vpop.xlane.xlu0 %653
        %655 = vadd.xlane.f32.xlu0 %v539
        %v656 = vpop.xlane.xlu0 %655
        %657 = vadd.xlane.f32.xlu0 %v540
        %v658 = vpop.xlane.xlu0 %657
        %659 = vadd.xlane.f32.xlu0 %v541
        %v660 = vpop.xlane.xlu0 %659
        %661 = vadd.xlane.f32.xlu0 %v542
        %v662 = vpop.xlane.xlu0 %661
        %663 = vadd.xlane.f32.xlu0 %v543
        %v664 = vpop.xlane.xlu0 %663
        %665 = vadd.xlane.f32.xlu0 %v544
        %v666 = vpop.xlane.xlu0 %665
        %667 = vadd.xlane.f32.xlu0 %v545
        %v668 = vpop.xlane.xlu0 %667
        %669 = vadd.xlane.f32.xlu0 %v546
        %v670 = vpop.xlane.xlu0 %669
        %671 = vadd.xlane.f32.xlu0 %v547
        %v672 = vpop.xlane.xlu0 %671
        %673 = vadd.xlane.f32.xlu0 %v548
        %v674 = vpop.xlane.xlu0 %673
        %675 = vadd.xlane.f32.xlu0 %v549
        %v676 = vpop.xlane.xlu0 %675
        %677 = vadd.xlane.f32.xlu0 %v550
        %v678 = vpop.xlane.xlu0 %677
        %v679 = vmul.f32 %v552, %v358
        %v680 = vmul.f32 %v554, %v358
        %v681 = vmul.f32 %v556, %v358
        %v682 = vmul.f32 %v558, %v358
        %v683 = vmul.f32 %v560, %v358
        %v684 = vmul.f32 %v562, %v358
        %v685 = vmul.f32 %v564, %v358
        %v686 = vmul.f32 %v566, %v358
        %v687 = vmul.f32 %v568, %v358
        %v688 = vmul.f32 %v570, %v358
        %v689 = vmul.f32 %v572, %v358
        %v690 = vmul.f32 %v574, %v358
        %v691 = vmul.f32 %v576, %v358
        %v692 = vmul.f32 %v578, %v358
        %v693 = vmul.f32 %v580, %v358
        %v694 = vmul.f32 %v582, %v358
        %v695 = vmul.f32 %v584, %v358
        %v696 = vmul.f32 %v586, %v358
        %v697 = vmul.f32 %v588, %v358
        %v698 = vmul.f32 %v590, %v358
        %v699 = vmul.f32 %v592, %v358
        %v700 = vmul.f32 %v594, %v358
        %v701 = vmul.f32 %v596, %v358
        %v702 = vmul.f32 %v598, %v358
        %v703 = vmul.f32 %v600, %v358
        %v704 = vmul.f32 %v602, %v358
        %v705 = vmul.f32 %v604, %v358
        %v706 = vmul.f32 %v606, %v358
        %v707 = vmul.f32 %v608, %v358
        %v708 = vmul.f32 %v610, %v358
        %v709 = vmul.f32 %v612, %v358
        %v710 = vmul.f32 %v614, %v358
        %v711 = vmul.f32 %v616, %v358
        %v712 = vmul.f32 %v618, %v358
        %v713 = vmul.f32 %v620, %v358
        %v714 = vmul.f32 %v622, %v358
        %v715 = vmul.f32 %v624, %v358
        %v716 = vmul.f32 %v626, %v358
        %v717 = vmul.f32 %v628, %v358
        %v718 = vmul.f32 %v630, %v358
        %v719 = vmul.f32 %v632, %v358
        %v720 = vmul.f32 %v634, %v358
        %v721 = vmul.f32 %v636, %v358
        %v722 = vmul.f32 %v638, %v358
        %v723 = vmul.f32 %v640, %v358
        %v724 = vmul.f32 %v642, %v358
        %v725 = vmul.f32 %v644, %v358
        %v726 = vmul.f32 %v646, %v358
        %v727 = vmul.f32 %v648, %v358
        %v728 = vmul.f32 %v650, %v358
        %v729 = vmul.f32 %v652, %v358
        %v730 = vmul.f32 %v654, %v358
        %v731 = vmul.f32 %v656, %v358
        %v732 = vmul.f32 %v658, %v358
        %v733 = vmul.f32 %v660, %v358
        %v734 = vmul.f32 %v662, %v358
        %v735 = vmul.f32 %v664, %v358
        %v736 = vmul.f32 %v666, %v358
        %v737 = vmul.f32 %v668, %v358
        %v738 = vmul.f32 %v670, %v358
        %v739 = vmul.f32 %v672, %v358
        %v740 = vmul.f32 %v674, %v358
        %v741 = vmul.f32 %v676, %v358
        %v742 = vmul.f32 %v678, %v358
        %v743 = vadd.f32 %v679, 1e-12
        %v744 = vadd.f32 %v680, 1e-12
        %v745 = vadd.f32 %v681, 1e-12
        %v746 = vadd.f32 %v682, 1e-12
        %v747 = vadd.f32 %v683, 1e-12
        %v748 = vadd.f32 %v684, 1e-12
        %v749 = vadd.f32 %v685, 1e-12
        %v750 = vadd.f32 %v686, 1e-12
        %v751 = vadd.f32 %v687, 1e-12
        %v752 = vadd.f32 %v688, 1e-12
        %v753 = vadd.f32 %v689, 1e-12
        %v754 = vadd.f32 %v690, 1e-12
        %v755 = vadd.f32 %v691, 1e-12
        %v756 = vadd.f32 %v692, 1e-12
        %v757 = vadd.f32 %v693, 1e-12
        %v758 = vadd.f32 %v694, 1e-12
        %v759 = vadd.f32 %v695, 1e-12
        %v760 = vadd.f32 %v696, 1e-12
        %v761 = vadd.f32 %v697, 1e-12
        %v762 = vadd.f32 %v698, 1e-12
        %v763 = vadd.f32 %v699, 1e-12
        %v764 = vadd.f32 %v700, 1e-12
        %v765 = vadd.f32 %v701, 1e-12
        %v766 = vadd.f32 %v702, 1e-12
        %v767 = vadd.f32 %v703, 1e-12
        %v768 = vadd.f32 %v704, 1e-12
        %v769 = vadd.f32 %v705, 1e-12
        %v770 = vadd.f32 %v706, 1e-12
        %v771 = vadd.f32 %v707, 1e-12
        %v772 = vadd.f32 %v708, 1e-12
        %v773 = vadd.f32 %v709, 1e-12
        %v774 = vadd.f32 %v710, 1e-12
        %v775 = vadd.f32 %v711, 1e-12
        %v776 = vadd.f32 %v712, 1e-12
        %v777 = vadd.f32 %v713, 1e-12
        %v778 = vadd.f32 %v714, 1e-12
        %v779 = vadd.f32 %v715, 1e-12
        %v780 = vadd.f32 %v716, 1e-12
        %v781 = vadd.f32 %v717, 1e-12
        %v782 = vadd.f32 %v718, 1e-12
        %v783 = vadd.f32 %v719, 1e-12
        %v784 = vadd.f32 %v720, 1e-12
        %v785 = vadd.f32 %v721, 1e-12
        %v786 = vadd.f32 %v722, 1e-12
        %v787 = vadd.f32 %v723, 1e-12
        %v788 = vadd.f32 %v724, 1e-12
        %v789 = vadd.f32 %v725, 1e-12
        %v790 = vadd.f32 %v726, 1e-12
        %v791 = vadd.f32 %v727, 1e-12
        %v792 = vadd.f32 %v728, 1e-12
        %v793 = vadd.f32 %v729, 1e-12
        %v794 = vadd.f32 %v730, 1e-12
        %v795 = vadd.f32 %v731, 1e-12
        %v796 = vadd.f32 %v732, 1e-12
        %v797 = vadd.f32 %v733, 1e-12
        %v798 = vadd.f32 %v734, 1e-12
        %v799 = vadd.f32 %v735, 1e-12
        %v800 = vadd.f32 %v736, 1e-12
        %v801 = vadd.f32 %v737, 1e-12
        %v802 = vadd.f32 %v738, 1e-12
        %v803 = vadd.f32 %v739, 1e-12
        %v804 = vadd.f32 %v740, 1e-12
        %v805 = vadd.f32 %v741, 1e-12
        %v806 = vadd.f32 %v742, 1e-12
        %v807 = vrsqrt.pop %v743
        %v808 = vrsqrt.pop %v744
        %v809 = vrsqrt.pop %v745
        %v810 = vrsqrt.pop %v746
        %v811 = vrsqrt.pop %v747
        %v812 = vrsqrt.pop %v748
        %v813 = vrsqrt.pop %v749
        %v814 = vrsqrt.pop %v750
        %v815 = vrsqrt.pop %v751
        %v816 = vrsqrt.pop %v752
        %v817 = vrsqrt.pop %v753
        %v818 = vrsqrt.pop %v754
        %v819 = vrsqrt.pop %v755
        %v820 = vrsqrt.pop %v756
        %v821 = vrsqrt.pop %v757
        %v822 = vrsqrt.pop %v758
        %v823 = vrsqrt.pop %v759
        %v824 = vrsqrt.pop %v760
        %v825 = vrsqrt.pop %v761
        %v826 = vrsqrt.pop %v762
        %v827 = vrsqrt.pop %v763
        %v828 = vrsqrt.pop %v764
        %v829 = vrsqrt.pop %v765
        %v830 = vrsqrt.pop %v766
        %v831 = vrsqrt.pop %v767
        %v832 = vrsqrt.pop %v768
        %v833 = vrsqrt.pop %v769
        %v834 = vrsqrt.pop %v770
        %v835 = vrsqrt.pop %v771
        %v836 = vrsqrt.pop %v772
        %v837 = vrsqrt.pop %v773
        %v838 = vrsqrt.pop %v774
        %v839 = vrsqrt.pop %v775
        %v840 = vrsqrt.pop %v776
        %v841 = vrsqrt.pop %v777
        %v842 = vrsqrt.pop %v778
        %v843 = vrsqrt.pop %v779
        %v844 = vrsqrt.pop %v780
        %v845 = vrsqrt.pop %v781
        %v846 = vrsqrt.pop %v782
        %v847 = vrsqrt.pop %v783
        %v848 = vrsqrt.pop %v784
        %v849 = vrsqrt.pop %v785
        %v850 = vrsqrt.pop %v786
        %v851 = vrsqrt.pop %v787
        %v852 = vrsqrt.pop %v788
        %v853 = vrsqrt.pop %v789
        %v854 = vrsqrt.pop %v790
        %v855 = vrsqrt.pop %v791
        %v856 = vrsqrt.pop %v792
        %v857 = vrsqrt.pop %v793
        %v858 = vrsqrt.pop %v794
        %v859 = vrsqrt.pop %v795
        %v860 = vrsqrt.pop %v796
        %v861 = vrsqrt.pop %v797
        %v862 = vrsqrt.pop %v798
        %v863 = vrsqrt.pop %v799
        %v864 = vrsqrt.pop %v800
        %v865 = vrsqrt.pop %v801
        %v866 = vrsqrt.pop %v802
        %v867 = vrsqrt.pop %v803
        %v868 = vrsqrt.pop %v804
        %v869 = vrsqrt.pop %v805
        %v870 = vrsqrt.pop %v806
        %v871 = vmul.f32 %v423, %v807
        %v872 = vmul.f32 %v424, %v808
        %v873 = vmul.f32 %v425, %v809
        %v874 = vmul.f32 %v426, %v810
        %v875 = vmul.f32 %v427, %v811
        %v876 = vmul.f32 %v428, %v812
        %v877 = vmul.f32 %v429, %v813
        %v878 = vmul.f32 %v430, %v814
        %v879 = vmul.f32 %v431, %v815
        %v880 = vmul.f32 %v432, %v816
        %v881 = vmul.f32 %v433, %v817
        %v882 = vmul.f32 %v434, %v818
        %v883 = vmul.f32 %v435, %v819
        %v884 = vmul.f32 %v436, %v820
        %v885 = vmul.f32 %v437, %v821
        %v886 = vmul.f32 %v438, %v822
        %v887 = vmul.f32 %v439, %v823
        %v888 = vmul.f32 %v440, %v824
        %v889 = vmul.f32 %v441, %v825
        %v890 = vmul.f32 %v442, %v826
        %v891 = vmul.f32 %v443, %v827
        %v892 = vmul.f32 %v444, %v828
        %v893 = vmul.f32 %v445, %v829
        %v894 = vmul.f32 %v446, %v830
        %v895 = vmul.f32 %v447, %v831
        %v896 = vmul.f32 %v448, %v832
        %v897 = vmul.f32 %v449, %v833
        %v898 = vmul.f32 %v450, %v834
        %v899 = vmul.f32 %v451, %v835
        %v900 = vmul.f32 %v452, %v836
        %v901 = vmul.f32 %v453, %v837
        %v902 = vmul.f32 %v454, %v838
        %v903 = vmul.f32 %v455, %v839
        %v904 = vmul.f32 %v456, %v840
        %v905 = vmul.f32 %v457, %v841
        %v906 = vmul.f32 %v458, %v842
        %v907 = vmul.f32 %v459, %v843
        %v908 = vmul.f32 %v460, %v844
        %v909 = vmul.f32 %v461, %v845
        %v910 = vmul.f32 %v462, %v846
        %v911 = vmul.f32 %v463, %v847
        %v912 = vmul.f32 %v464, %v848
        %v913 = vmul.f32 %v465, %v849
        %v914 = vmul.f32 %v466, %v850
        %v915 = vmul.f32 %v467, %v851
        %v916 = vmul.f32 %v468, %v852
        %v917 = vmul.f32 %v469, %v853
        %v918 = vmul.f32 %v470, %v854
        %v919 = vmul.f32 %v471, %v855
        %v920 = vmul.f32 %v472, %v856
        %v921 = vmul.f32 %v473, %v857
        %v922 = vmul.f32 %v474, %v858
        %v923 = vmul.f32 %v475, %v859
        %v924 = vmul.f32 %v476, %v860
        %v925 = vmul.f32 %v477, %v861
        %v926 = vmul.f32 %v478, %v862
        %v927 = vmul.f32 %v479, %v863
        %v928 = vmul.f32 %v480, %v864
        %v929 = vmul.f32 %v481, %v865
        %v930 = vmul.f32 %v482, %v866
        %v931 = vmul.f32 %v483, %v867
        %v932 = vmul.f32 %v484, %v868
        %v933 = vmul.f32 %v485, %v869
        %v934 = vmul.f32 %v486, %v870
        %v935 = vlaneseq
        %v936 = vshrl.u32 %v935, 7
        %v937 = vsub.s32 0, %v936
        %v938 = vrot.slane %v228, %v937
        %v939 = vmul.f32 %v871, %v938
        %v940 = vmul.f32 %v872, %v938
        %v941 = vmul.f32 %v873, %v938
        %v942 = vmul.f32 %v874, %v938
        %v943 = vmul.f32 %v875, %v938
        %v944 = vmul.f32 %v876, %v938
        %v945 = vmul.f32 %v877, %v938
        %v946 = vmul.f32 %v878, %v938
        %v947 = vmul.f32 %v879, %v938
        %v948 = vmul.f32 %v880, %v938
        %v949 = vmul.f32 %v881, %v938
        %v950 = vmul.f32 %v882, %v938
        %v951 = vmul.f32 %v883, %v938
        %v952 = vmul.f32 %v884, %v938
        %v953 = vmul.f32 %v885, %v938
        %v954 = vmul.f32 %v886, %v938
        %v955 = vmul.f32 %v887, %v938
        %v956 = vmul.f32 %v888, %v938
        %v957 = vmul.f32 %v889, %v938
        %v958 = vmul.f32 %v890, %v938
        %v959 = vmul.f32 %v891, %v938
        %v960 = vmul.f32 %v892, %v938
        %v961 = vmul.f32 %v893, %v938
        %v962 = vmul.f32 %v894, %v938
        %v963 = vmul.f32 %v895, %v938
        %v964 = vmul.f32 %v896, %v938
        %v965 = vmul.f32 %v897, %v938
        %v966 = vmul.f32 %v898, %v938
        %v967 = vmul.f32 %v899, %v938
        %v968 = vmul.f32 %v900, %v938
        %v969 = vmul.f32 %v901, %v938
        %v970 = vmul.f32 %v902, %v938
        %v971 = vmul.f32 %v903, %v938
        %v972 = vmul.f32 %v904, %v938
        %v973 = vmul.f32 %v905, %v938
        %v974 = vmul.f32 %v906, %v938
        %v975 = vmul.f32 %v907, %v938
        %v976 = vmul.f32 %v908, %v938
        %v977 = vmul.f32 %v909, %v938
        %v978 = vmul.f32 %v910, %v938
        %v979 = vmul.f32 %v911, %v938
        %v980 = vmul.f32 %v912, %v938
        %v981 = vmul.f32 %v913, %v938
        %v982 = vmul.f32 %v914, %v938
        %v983 = vmul.f32 %v915, %v938
        %v984 = vmul.f32 %v916, %v938
        %v985 = vmul.f32 %v917, %v938
        %v986 = vmul.f32 %v918, %v938
        %v987 = vmul.f32 %v919, %v938
        %v988 = vmul.f32 %v920, %v938
        %v989 = vmul.f32 %v921, %v938
        %v990 = vmul.f32 %v922, %v938
        %v991 = vmul.f32 %v923, %v938
        %v992 = vmul.f32 %v924, %v938
        %v993 = vmul.f32 %v925, %v938
        %v994 = vmul.f32 %v926, %v938
        %v995 = vmul.f32 %v927, %v938
        %v996 = vmul.f32 %v928, %v938
        %v997 = vmul.f32 %v929, %v938
        %v998 = vmul.f32 %v930, %v938
        %v999 = vmul.f32 %v931, %v938
        %v1000 = vmul.f32 %v932, %v938
        %v1001 = vmul.f32 %v933, %v938
        %v1002 = vmul.f32 %v934, %v938
        %v1003 = vlaneseq
        %v1004 = vshrl.u32 %v1003, 7
        %v1005 = vsub.s32 0, %v1004
        %v1006 = vrot.slane %v229, %v1005
        %v1007 = vadd.f32 %v939, %v1006
        %v1008 = vadd.f32 %v940, %v1006
        %v1009 = vadd.f32 %v941, %v1006
        %v1010 = vadd.f32 %v942, %v1006
        %v1011 = vadd.f32 %v943, %v1006
        %v1012 = vadd.f32 %v944, %v1006
        %v1013 = vadd.f32 %v945, %v1006
        %v1014 = vadd.f32 %v946, %v1006
        %v1015 = vadd.f32 %v947, %v1006
        %v1016 = vadd.f32 %v948, %v1006
        %v1017 = vadd.f32 %v949, %v1006
        %v1018 = vadd.f32 %v950, %v1006
        %v1019 = vadd.f32 %v951, %v1006
        %v1020 = vadd.f32 %v952, %v1006
        %v1021 = vadd.f32 %v953, %v1006
        %v1022 = vadd.f32 %v954, %v1006
        %v1023 = vadd.f32 %v955, %v1006
        %v1024 = vadd.f32 %v956, %v1006
        %v1025 = vadd.f32 %v957, %v1006
        %v1026 = vadd.f32 %v958, %v1006
        %v1027 = vadd.f32 %v959, %v1006
        %v1028 = vadd.f32 %v960, %v1006
        %v1029 = vadd.f32 %v961, %v1006
        %v1030 = vadd.f32 %v962, %v1006
        %v1031 = vadd.f32 %v963, %v1006
        %v1032 = vadd.f32 %v964, %v1006
        %v1033 = vadd.f32 %v965, %v1006
        %v1034 = vadd.f32 %v966, %v1006
        %v1035 = vadd.f32 %v967, %v1006
        %v1036 = vadd.f32 %v968, %v1006
        %v1037 = vadd.f32 %v969, %v1006
        %v1038 = vadd.f32 %v970, %v1006
        %v1039 = vadd.f32 %v971, %v1006
        %v1040 = vadd.f32 %v972, %v1006
        %v1041 = vadd.f32 %v973, %v1006
        %v1042 = vadd.f32 %v974, %v1006
        %v1043 = vadd.f32 %v975, %v1006
        %v1044 = vadd.f32 %v976, %v1006
        %v1045 = vadd.f32 %v977, %v1006
        %v1046 = vadd.f32 %v978, %v1006
        %v1047 = vadd.f32 %v979, %v1006
        %v1048 = vadd.f32 %v980, %v1006
        %v1049 = vadd.f32 %v981, %v1006
        %v1050 = vadd.f32 %v982, %v1006
        %v1051 = vadd.f32 %v983, %v1006
        %v1052 = vadd.f32 %v984, %v1006
        %v1053 = vadd.f32 %v985, %v1006
        %v1054 = vadd.f32 %v986, %v1006
        %v1055 = vadd.f32 %v987, %v1006
        %v1056 = vadd.f32 %v988, %v1006
        %v1057 = vadd.f32 %v989, %v1006
        %v1058 = vadd.f32 %v990, %v1006
        %v1059 = vadd.f32 %v991, %v1006
        %v1060 = vadd.f32 %v992, %v1006
        %v1061 = vadd.f32 %v993, %v1006
        %v1062 = vadd.f32 %v994, %v1006
        %v1063 = vadd.f32 %v995, %v1006
        %v1064 = vadd.f32 %v996, %v1006
        %v1065 = vadd.f32 %v997, %v1006
        %v1066 = vadd.f32 %v998, %v1006
        %v1067 = vadd.f32 %v999, %v1006
        %v1068 = vadd.f32 %v1000, %v1006
        %v1069 = vadd.f32 %v1001, %v1006
        %v1070 = vadd.f32 %v1002, %v1006
        %1071 = vst [vmem:[%s161] sm:$0xff] %v1007
        %1072 = vst [vmem:[%s161 + $0x8] sm:$0xff] %v1008
        %1073 = vst [vmem:[%s161 + $0x10] sm:$0xff] %v1009
        %1074 = vst [vmem:[%s161 + $0x18] sm:$0xff] %v1010
        %1075 = vst [vmem:[%s161 + $0x20] sm:$0xff] %v1011
        %1076 = vst [vmem:[%s161 + $0x28] sm:$0xff] %v1012
        %1077 = vst [vmem:[%s161 + $0x30] sm:$0xff] %v1013
        %1078 = vst [vmem:[%s161 + $0x38] sm:$0xff] %v1014
        %1079 = vst [vmem:[%s161 + $0x40] sm:$0xff] %v1015
        %1080 = vst [vmem:[%s161 + $0x48] sm:$0xff] %v1016
        %1081 = vst [vmem:[%s161 + $0x50] sm:$0xff] %v1017
        %1082 = vst [vmem:[%s161 + $0x58] sm:$0xff] %v1018
        %1083 = vst [vmem:[%s161 + $0x60] sm:$0xff] %v1019
        %1084 = vst [vmem:[%s161 + $0x68] sm:$0xff] %v1020
        %1085 = vst [vmem:[%s161 + $0x70] sm:$0xff] %v1021
        %1086 = vst [vmem:[%s161 + $0x78] sm:$0xff] %v1022
        %1087 = vst [vmem:[%s161 + $0x80] sm:$0xff] %v1023
        %1088 = vst [vmem:[%s161 + $0x88] sm:$0xff] %v1024
        %1089 = vst [vmem:[%s161 + $0x90] sm:$0xff] %v1025
        %1090 = vst [vmem:[%s161 + $0x98] sm:$0xff] %v1026
        %1091 = vst [vmem:[%s161 + $0xa0] sm:$0xff] %v1027
        %1092 = vst [vmem:[%s161 + $0xa8] sm:$0xff] %v1028
        %1093 = vst [vmem:[%s161 + $0xb0] sm:$0xff] %v1029
        %1094 = vst [vmem:[%s161 + $0xb8] sm:$0xff] %v1030
        %1095 = vst [vmem:[%s161 + $0xc0] sm:$0xff] %v1031
        %1096 = vst [vmem:[%s161 + $0xc8] sm:$0xff] %v1032
        %1097 = vst [vmem:[%s161 + $0xd0] sm:$0xff] %v1033
        %1098 = vst [vmem:[%s161 + $0xd8] sm:$0xff] %v1034
        %1099 = vst [vmem:[%s161 + $0xe0] sm:$0xff] %v1035
        %1100 = vst [vmem:[%s161 + $0xe8] sm:$0xff] %v1036
        %1101 = vst [vmem:[%s161 + $0xf0] sm:$0xff] %v1037
        %1102 = vst [vmem:[%s161 + $0xf8] sm:$0xff] %v1038
        %1103 = vst [vmem:[%s161 + $0x100] sm:$0xff] %v1039
        %1104 = vst [vmem:[%s161 + $0x108] sm:$0xff] %v1040
        %1105 = vst [vmem:[%s161 + $0x110] sm:$0xff] %v1041
        %1106 = vst [vmem:[%s161 + $0x118] sm:$0xff] %v1042
        %1107 = vst [vmem:[%s161 + $0x120] sm:$0xff] %v1043
        %1108 = vst [vmem:[%s161 + $0x128] sm:$0xff] %v1044
        %1109 = vst [vmem:[%s161 + $0x130] sm:$0xff] %v1045
        %1110 = vst [vmem:[%s161 + $0x138] sm:$0xff] %v1046
        %1111 = vst [vmem:[%s161 + $0x140] sm:$0xff] %v1047
        %1112 = vst [vmem:[%s161 + $0x148] sm:$0xff] %v1048
        %1113 = vst [vmem:[%s161 + $0x150] sm:$0xff] %v1049
        %1114 = vst [vmem:[%s161 + $0x158] sm:$0xff] %v1050
        %1115 = vst [vmem:[%s161 + $0x160] sm:$0xff] %v1051
        %1116 = vst [vmem:[%s161 + $0x168] sm:$0xff] %v1052
        %1117 = vst [vmem:[%s161 + $0x170] sm:$0xff] %v1053
        %1118 = vst [vmem:[%s161 + $0x178] sm:$0xff] %v1054
        %1119 = vst [vmem:[%s161 + $0x180] sm:$0xff] %v1055
        %1120 = vst [vmem:[%s161 + $0x188] sm:$0xff] %v1056
        %1121 = vst [vmem:[%s161 + $0x190] sm:$0xff] %v1057
        %1122 = vst [vmem:[%s161 + $0x198] sm:$0xff] %v1058
        %1123 = vst [vmem:[%s161 + $0x1a0] sm:$0xff] %v1059
        %1124 = vst [vmem:[%s161 + $0x1a8] sm:$0xff] %v1060
        %1125 = vst [vmem:[%s161 + $0x1b0] sm:$0xff] %v1061
        %1126 = vst [vmem:[%s161 + $0x1b8] sm:$0xff] %v1062
        %1127 = vst [vmem:[%s161 + $0x1c0] sm:$0xff] %v1063
        %1128 = vst [vmem:[%s161 + $0x1c8] sm:$0xff] %v1064
        %1129 = vst [vmem:[%s161 + $0x1d0] sm:$0xff] %v1065
        %1130 = vst [vmem:[%s161 + $0x1d8] sm:$0xff] %v1066
        %1131 = vst [vmem:[%s161 + $0x1e0] sm:$0xff] %v1067
        %1132 = vst [vmem:[%s161 + $0x1e8] sm:$0xff] %v1068
        %1133 = vst [vmem:[%s161 + $0x1f0] sm:$0xff] %v1069
        %1134 = vst [vmem:[%s161 + $0x1f8] sm:$0xff] %v1070
        %s1135 = sand.u32 %s74, 1
        %s1136 = scalar_lea.sflag [#allocation4], %s1135
        %s1137 = sand.u32 %s74, 1
        %s1138 = smul.addr %s1137, 512
        %s1139 = scalar_lea.vmem [#allocation5], %s1138
        // Predicated region
        $region33: #{tpu_custom_call.1} parent=27 // pred_check
          %p1140 = pneg %p84
        $region34: #{tpu_custom_call.1} parent=27 // pred_check_branch
          %1142 = sbr.rel (%p1140) target = $region36
        $region35: #{tpu_custom_call.1} parent=27 // pred_region
          %s1143 = smul.u32 64, %s19
          %s1145 = ssub.s32 8192, 8192
          %1146 = vsyncadd %s1136, %s1145
          %s1147 = smul.addr %s1143, 128
          %s1148 = scalar_lea.hbm %s2, %s1147
          %s1149 = sshll.u32 %s1139, 4
          %s1150 = int_to_ptr.vmem [resolvable:$true] %s1149
          %1155 = dma.vmem_to_hbm [thread:$0]  %s1150, 8192, %s1148, %s1136, 128, 128, 8
        $region36: #{tpu_custom_call.1} parent=27 // pred_fallthru
          _
      $region28: #{tpu_custom_call.1} parent=5 // pred_fallthru
        _
      %p1156 = scmp.le.s32.totalorder 2, %s14
      // Predicated region
      $region37: #{tpu_custom_call.1} parent=5 // pred_check
        %p1157 = pneg %p1156
      $region38: #{tpu_custom_call.1} parent=5 // pred_check_branch
        %1159 = sbr.rel (%p1157) target = $region40
      $region39: #{tpu_custom_call.1} parent=5 // pred_region
        %s1160 = ssub.s32 %s14, 2
        // Predicated region
        $region41: #{tpu_custom_call.1} parent=39 // pred_check
          %p1161 = pneg %p90
        $region42: #{tpu_custom_call.1} parent=39 // pred_check_branch
          %1163 = sbr.rel (%p1161) target = $region44
        $region43: #{tpu_custom_call.1} parent=39 // pred_region
          %s1164 = sand.u32 %s75, 1
          %s1165 = scalar_lea.sflag [#allocation4], %s1164
          %s1166 = sand.u32 %s75, 1
          %s1167 = smul.addr %s1166, 512
          %s1168 = scalar_lea.vmem [#allocation5], %s1167
          %1169 = dma.done %s1165, 8192
        $region44: #{tpu_custom_call.1} parent=39 // pred_fallthru
          _
      $region40: #{tpu_custom_call.1} parent=5 // pred_fallthru
        _
    $region6: #{tpu_custom_call.1} parent=1 // loop_footer
      %s18 = sadd.s32 1, %s14
    $region7: #{tpu_custom_call.1} parent=1 // loop_footer_branch
      %13 = sbr.rel target = $region3
    $region8: #{tpu_custom_call.1} parent=1 // loop_exit
      _
    %1170 = vsyncpa [#allocation3], 1
    %s1171 = scalar_lea.sflag [#allocation3], 1
    %1172 = vsyncpa %s1171, 1
    %1173 = vsyncpa [#allocation4], 1
    %s1174 = scalar_lea.sflag [#allocation4], 1
    %1175 = vsyncpa %s1174, 1

</llo_original>
